<compile_context>
chip_gen: v5e
topology: v5e:2x2
jax: 0.10.0
libtpu: 0.0.40
codegen_flags: <defaults>
</compile_context>

<pallas_src>
import functools

import jax
import jax.numpy as jnp
from jax import lax
from jax.experimental import pallas as pl
from jax.experimental.pallas import tpu as pltpu

MARGIN = 1.0
EPS = 1e-6          # matches torch.nn.functional.pairwise_distance default
LAMB = 0.5


def _triplet_lfl_kernel(anchor_ref, pos_ref, neg_ref, old_anchor_ref,
                        loss_ref, metric_ref,
                        hinge_acc, count_acc, dist_acc,
                        *, batch, block_rows, margin, lamb):
    i = pl.program_id(0)

    @pl.when(i == 0)
    def _init():
        hinge_acc[...] = jnp.zeros_like(hinge_acc)
        count_acc[...] = jnp.zeros_like(count_acc)
        dist_acc[...] = jnp.zeros_like(dist_acc)

    # Upcast on load (inputs may be bf16; VPU is idle in this mem-bound kernel).
    a = anchor_ref[...].astype(jnp.float32)
    p = pos_ref[...].astype(jnp.float32)
    n = neg_ref[...].astype(jnp.float32)
    oa = old_anchor_ref[...].astype(jnp.float32)

    # Squared pairwise distances: one cross-lane reduce each, keepdims -> (TB,1).
    sq_ap = jnp.sum((a - p + EPS) ** 2, axis=-1, keepdims=True)
    sq_an = jnp.sum((a - n + EPS) ** 2, axis=-1, keepdims=True)

    # Hinge needs the true L2 distances (sqrt on the EUP slot); the metric only
    # needs the ordering, so compare squared distances directly (sqrt monotone).
    hinge = jnp.maximum(jnp.sqrt(sq_ap) - jnp.sqrt(sq_an) + margin, 0.0)
    correct = (sq_an > sq_ap).astype(jnp.float32)

    # LFL distillation term, per-row partial sum.
    row_dist = jnp.sum((oa - a) ** 2, axis=-1, keepdims=True)

    # Ragged last tile: mask rows beyond `batch` (padding contents undefined).
    if batch % block_rows != 0:
        row = lax.broadcasted_iota(jnp.int32, (block_rows, 1), 0) + i * block_rows
        valid = row < batch
        hinge = jnp.where(valid, hinge, 0.0)
        correct = jnp.where(valid, correct, 0.0)
        row_dist = jnp.where(valid, row_dist, 0.0)

    hinge_acc[...] += jnp.sum(hinge, axis=0, keepdims=True)
    count_acc[...] += jnp.sum(correct, axis=0, keepdims=True)
    dist_acc[...] += jnp.sum(row_dist, axis=0, keepdims=True)

    @pl.when(i == pl.num_programs(0) - 1)
    def _finalize():
        inv_b = 1.0 / batch
        loss_ref[0, 0] = hinge_acc[0, 0] * inv_b + lamb * 0.5 * dist_acc[0, 0]
        metric_ref[0, 0] = count_acc[0, 0] * inv_b


def _pick_block_rows(batch, feat, itemsize, vmem_budget_bytes=24 * 1024 * 1024):
    """Largest row tile (multiple of 8, <=512) whose double-buffered 4-input
    footprint fits the budget; small batches use a single full block."""
    if batch <= 8:
        return batch
    bytes_per_row = 4 * 2 * feat * itemsize          # 4 inputs x 2 buffers
    cap = max(8, min(512, (vmem_budget_bytes // bytes_per_row) // 8 * 8))
    return min(cap, (batch // 8) * 8)


def triplet_lfl(anchor, positive, negative, old_anchor, *,
                margin=MARGIN, lamb=LAMB):
    B, D = anchor.shape
    tb = _pick_block_rows(B, D, jnp.dtype(anchor.dtype).itemsize)
    grid = (pl.cdiv(B, tb),)

    in_spec = pl.BlockSpec((tb, D), lambda i: (i, 0))
    smem_out = pl.BlockSpec(memory_space=pltpu.SMEM)

    kernel = functools.partial(_triplet_lfl_kernel,
                               batch=B, block_rows=tb,
                               margin=margin, lamb=lamb)

    loss, metric = pl.pallas_call(
        kernel,
        out_shape=(
            jax.ShapeDtypeStruct((1, 1), jnp.float32),
            jax.ShapeDtypeStruct((1, 1), jnp.float32),
        ),
        grid_spec=pltpu.PrefetchScalarGridSpec(
            num_scalar_prefetch=0,
            grid=grid,
            in_specs=[in_spec, in_spec, in_spec, in_spec],
            out_specs=(smem_out, smem_out),
            scratch_shapes=[pltpu.VMEM((1, 1), jnp.float32),
                            pltpu.VMEM((1, 1), jnp.float32),
                            pltpu.VMEM((1, 1), jnp.float32)],
        ),
        compiler_params=pltpu.CompilerParams(
            dimension_semantics=("arbitrary",),      # sequential reduction axis
            vmem_limit_bytes=48 * 1024 * 1024,
        ),
    )(anchor, positive, negative, old_anchor)
    return loss[0, 0], metric[0, 0]


def triplet_lfl_ref(anchor, positive, negative, old_anchor,
                    *, margin=MARGIN, lamb=LAMB):
    a = anchor.astype(jnp.float32)
    p = positive.astype(jnp.float32)
    n = negative.astype(jnp.float32)
    oa = old_anchor.astype(jnp.float32)
    d_ap = jnp.sqrt(jnp.sum((a - p + EPS) ** 2, axis=-1))
    d_an = jnp.sqrt(jnp.sum((a - n + EPS) ** 2, axis=-1))
    triplet_loss = jnp.mean(jnp.maximum(d_ap - d_an + margin, 0.0))
    metric = jnp.mean((d_an > d_ap).astype(jnp.float32))
    loss_dist = jnp.sum((oa - a) ** 2) * 0.5
    return triplet_loss + lamb * loss_dist, metric


if __name__ == "__main__":
    key = jax.random.PRNGKey(0)
    k1, k2, k3, k4 = jax.random.split(key, 4)
    # B=20, D=128 -> block_rows=16, grid=2, ragged last tile (masking exercised).
    B, D = 20, 128
    anchor = jax.random.normal(k1, (B, D), dtype=jnp.float32)
    positive = anchor + 0.1 * jax.random.normal(k2, (B, D), dtype=jnp.float32)
    negative = jax.random.normal(k3, (B, D), dtype=jnp.float32)
    old_anchor = anchor + 0.05 * jax.random.normal(k4, (B, D), dtype=jnp.float32)

    loss, metric = triplet_lfl(anchor, positive, negative, old_anchor)
    jax.block_until_ready((loss, metric))

    ref_loss, ref_metric = triplet_lfl_ref(anchor, positive, negative, old_anchor)
    assert jnp.allclose(loss, ref_loss, rtol=1e-5, atol=1e-5), (loss, ref_loss)
    assert jnp.allclose(metric, ref_metric, rtol=1e-5, atol=1e-5), (metric, ref_metric)

    print("KERNEL_OK")
</pallas_src>

<mosaic_0001>
module attributes {stable_mosaic.version = 11 : i64} {
  func.func @_triplet_lfl_kernel(%arg0: i32, %arg1: memref<16x128xf32, #tpu.memory_space<vmem>>, %arg2: memref<16x128xf32, #tpu.memory_space<vmem>>, %arg3: memref<16x128xf32, #tpu.memory_space<vmem>>, %arg4: memref<16x128xf32, #tpu.memory_space<vmem>>, %arg5: memref<1x1xf32, #tpu.memory_space<smem>>, %arg6: memref<1x1xf32, #tpu.memory_space<smem>>, %arg7: memref<1x1xf32, #tpu.memory_space<vmem>>, %arg8: memref<1x1xf32, #tpu.memory_space<vmem>>, %arg9: memref<1x1xf32, #tpu.memory_space<vmem>>) attributes {dimension_semantics = [#tpu.dimension_semantics<arbitrary>], iteration_bounds = array<i64: 2>, scalar_prefetch = 0 : i64, scratch_operands = 3 : i64, tpu.core_type = #tpu.core_type<tc>, window_params = [{transform_indices = @transform_0, window_bounds = array<i64: 16, 128>}, {transform_indices = @transform_1, window_bounds = array<i64: 16, 128>}, {transform_indices = @transform_2, window_bounds = array<i64: 16, 128>}, {transform_indices = @transform_3, window_bounds = array<i64: 16, 128>}, {transform_indices = @transform_4, window_bounds = array<i64: 1, 1>}, {transform_indices = @transform_5, window_bounds = array<i64: 1, 1>}]} {
    %c0_i32 = arith.constant 0 : i32
    %0 = arith.cmpi eq, %arg0, %c0_i32 : i32
    %1 = arith.extui %0 : i1 to i32
    %c0_i32_0 = arith.constant 0 : i32
    %2 = arith.cmpi ne, %1, %c0_i32_0 : i32
    scf.if %2 {
      %cst_33 = arith.constant 0.000000e+00 : f32
      %63 = vector.broadcast %cst_33 : f32 to vector<1x1xf32>
      %c0_34 = arith.constant 0 : index
      %c0_35 = arith.constant 0 : index
      %64 = vector.load %arg7[%c0_34, %c0_35] : memref<1x1xf32, #tpu.memory_space<vmem>>, vector<1x1xf32>
      tpu.vector_store %arg7[%c0_34, %c0_35], %63 {strides = array<i32>} : memref<1x1xf32, #tpu.memory_space<vmem>>, vector<1x1xf32>,
      %cst_36 = arith.constant 0.000000e+00 : f32
      %65 = vector.broadcast %cst_36 : f32 to vector<1x1xf32>
      %c0_37 = arith.constant 0 : index
      %c0_38 = arith.constant 0 : index
      %66 = vector.load %arg8[%c0_37, %c0_38] : memref<1x1xf32, #tpu.memory_space<vmem>>, vector<1x1xf32>
      tpu.vector_store %arg8[%c0_37, %c0_38], %65 {strides = array<i32>} : memref<1x1xf32, #tpu.memory_space<vmem>>, vector<1x1xf32>,
      %cst_39 = arith.constant 0.000000e+00 : f32
      %67 = vector.broadcast %cst_39 : f32 to vector<1x1xf32>
      %c0_40 = arith.constant 0 : index
      %c0_41 = arith.constant 0 : index
      %68 = vector.load %arg9[%c0_40, %c0_41] : memref<1x1xf32, #tpu.memory_space<vmem>>, vector<1x1xf32>
      tpu.vector_store %arg9[%c0_40, %c0_41], %67 {strides = array<i32>} : memref<1x1xf32, #tpu.memory_space<vmem>>, vector<1x1xf32>,
    } else {
    }
    %c0 = arith.constant 0 : index
    %c0_1 = arith.constant 0 : index
    %3 = vector.load %arg1[%c0, %c0_1] : memref<16x128xf32, #tpu.memory_space<vmem>>, vector<16x128xf32>
    %c0_2 = arith.constant 0 : index
    %c0_3 = arith.constant 0 : index
    %4 = vector.load %arg2[%c0_2, %c0_3] : memref<16x128xf32, #tpu.memory_space<vmem>>, vector<16x128xf32>
    %c0_4 = arith.constant 0 : index
    %c0_5 = arith.constant 0 : index
    %5 = vector.load %arg3[%c0_4, %c0_5] : memref<16x128xf32, #tpu.memory_space<vmem>>, vector<16x128xf32>
    %c0_6 = arith.constant 0 : index
    %c0_7 = arith.constant 0 : index
    %6 = vector.load %arg4[%c0_6, %c0_7] : memref<16x128xf32, #tpu.memory_space<vmem>>, vector<16x128xf32>
    %7 = arith.subf %3, %4 : vector<16x128xf32>
    %cst = arith.constant 9.99999997E-7 : f32
    %8 = vector.broadcast %cst : f32 to vector<16x128xf32>
    %9 = arith.addf %7, %8 : vector<16x128xf32>
    %10 = arith.mulf %9, %9 : vector<16x128xf32>
    %cst_8 = arith.constant dense<0.000000e+00> : vector<16xf32>
    %11 = vector.multi_reduction <add>, %10, %cst_8 [1] : vector<16x128xf32> to vector<16xf32>
    %12 = vector.shape_cast %11 : vector<16xf32> to vector<16x1xf32>
    %13 = arith.subf %3, %5 : vector<16x128xf32>
    %cst_9 = arith.constant 9.99999997E-7 : f32
    %14 = vector.broadcast %cst_9 : f32 to vector<16x128xf32>
    %15 = arith.addf %13, %14 : vector<16x128xf32>
    %16 = arith.mulf %15, %15 : vector<16x128xf32>
    %cst_10 = arith.constant dense<0.000000e+00> : vector<16xf32>
    %17 = vector.multi_reduction <add>, %16, %cst_10 [1] : vector<16x128xf32> to vector<16xf32>
    %18 = vector.shape_cast %17 : vector<16xf32> to vector<16x1xf32>
    %19 = math.sqrt %12 : vector<16x1xf32>
    %20 = math.sqrt %18 : vector<16x1xf32>
    %21 = arith.subf %19, %20 : vector<16x1xf32>
    %cst_11 = arith.constant 1.000000e+00 : f32
    %22 = vector.broadcast %cst_11 : f32 to vector<16x1xf32>
    %23 = arith.addf %21, %22 : vector<16x1xf32>
    %cst_12 = arith.constant 0.000000e+00 : f32
    %24 = vector.broadcast %cst_12 : f32 to vector<16x1xf32>
    %25 = arith.maximumf %23, %24 : vector<16x1xf32>
    %26 = arith.cmpf ogt, %18, %12 : vector<16x1xf32>
    %27 = arith.extui %26 : vector<16x1xi1> to vector<16x1xi32>
    %28 = arith.sitofp %27 : vector<16x1xi32> to vector<16x1xf32>
    %29 = arith.subf %6, %3 : vector<16x128xf32>
    %30 = arith.mulf %29, %29 : vector<16x128xf32>
    %cst_13 = arith.constant dense<0.000000e+00> : vector<16xf32>
    %31 = vector.multi_reduction <add>, %30, %cst_13 [1] : vector<16x128xf32> to vector<16xf32>
    %32 = vector.shape_cast %31 : vector<16xf32> to vector<16x1xf32>
    %33 = tpu.iota {dimensions = array<i32: 0>} : vector<16x1xi32>
    %c16_i32 = arith.constant 16 : i32
    %34 = arith.muli %arg0, %c16_i32 : i32
    %35 = vector.broadcast %34 : i32 to vector<16x1xi32>
    %36 = arith.addi %33, %35 : vector<16x1xi32>
    %c20_i32 = arith.constant 20 : i32
    %37 = vector.broadcast %c20_i32 : i32 to vector<16x1xi32>
    %38 = arith.cmpi slt, %36, %37 : vector<16x1xi32>
    %cst_14 = arith.constant 0.000000e+00 : f32
    %39 = vector.broadcast %cst_14 : f32 to vector<16x1xf32>
    %40 = arith.select %38, %25, %39 : vector<16x1xi1>, vector<16x1xf32>
    %cst_15 = arith.constant 0.000000e+00 : f32
    %41 = vector.broadcast %cst_15 : f32 to vector<16x1xf32>
    %42 = arith.select %38, %28, %41 : vector<16x1xi1>, vector<16x1xf32>
    %cst_16 = arith.constant 0.000000e+00 : f32
    %43 = vector.broadcast %cst_16 : f32 to vector<16x1xf32>
    %44 = arith.select %38, %32, %43 : vector<16x1xi1>, vector<16x1xf32>
    %c0_17 = arith.constant 0 : index
    %c0_18 = arith.constant 0 : index
    %45 = vector.load %arg7[%c0_17, %c0_18] : memref<1x1xf32, #tpu.memory_space<vmem>>, vector<1x1xf32>
    %cst_19 = arith.constant dense<0.000000e+00> : vector<1xf32>
    %46 = vector.multi_reduction <add>, %40, %cst_19 [0] : vector<16x1xf32> to vector<1xf32>
    %47 = vector.shape_cast %46 : vector<1xf32> to vector<1x1xf32>
    %48 = arith.addf %45, %47 : vector<1x1xf32>
    %c0_20 = arith.constant 0 : index
    %c0_21 = arith.constant 0 : index
    %49 = vector.load %arg7[%c0_20, %c0_21] : memref<1x1xf32, #tpu.memory_space<vmem>>, vector<1x1xf32>
    tpu.vector_store %arg7[%c0_20, %c0_21], %48 {strides = array<i32>} : memref<1x1xf32, #tpu.memory_space<vmem>>, vector<1x1xf32>,
    %c0_22 = arith.constant 0 : index
    %c0_23 = arith.constant 0 : index
    %50 = vector.load %arg8[%c0_22, %c0_23] : memref<1x1xf32, #tpu.memory_space<vmem>>, vector<1x1xf32>
    %cst_24 = arith.constant dense<0.000000e+00> : vector<1xf32>
    %51 = vector.multi_reduction <add>, %42, %cst_24 [0] : vector<16x1xf32> to vector<1xf32>
    %52 = vector.shape_cast %51 : vector<1xf32> to vector<1x1xf32>
    %53 = arith.addf %50, %52 : vector<1x1xf32>
    %c0_25 = arith.constant 0 : index
    %c0_26 = arith.constant 0 : index
    %54 = vector.load %arg8[%c0_25, %c0_26] : memref<1x1xf32, #tpu.memory_space<vmem>>, vector<1x1xf32>
    tpu.vector_store %arg8[%c0_25, %c0_26], %53 {strides = array<i32>} : memref<1x1xf32, #tpu.memory_space<vmem>>, vector<1x1xf32>,
    %c0_27 = arith.constant 0 : index
    %c0_28 = arith.constant 0 : index
    %55 = vector.load %arg9[%c0_27, %c0_28] : memref<1x1xf32, #tpu.memory_space<vmem>>, vector<1x1xf32>
    %cst_29 = arith.constant dense<0.000000e+00> : vector<1xf32>
    %56 = vector.multi_reduction <add>, %44, %cst_29 [0] : vector<16x1xf32> to vector<1xf32>
    %57 = vector.shape_cast %56 : vector<1xf32> to vector<1x1xf32>
    %58 = arith.addf %55, %57 : vector<1x1xf32>
    %c0_30 = arith.constant 0 : index
    %c0_31 = arith.constant 0 : index
    %59 = vector.load %arg9[%c0_30, %c0_31] : memref<1x1xf32, #tpu.memory_space<vmem>>, vector<1x1xf32>
    tpu.vector_store %arg9[%c0_30, %c0_31], %58 {strides = array<i32>} : memref<1x1xf32, #tpu.memory_space<vmem>>, vector<1x1xf32>,
    %c1_i32 = arith.constant 1 : i32
    %60 = arith.cmpi eq, %arg0, %c1_i32 : i32
    %61 = arith.extui %60 : i1 to i32
    %c0_i32_32 = arith.constant 0 : i32
    %62 = arith.cmpi ne, %61, %c0_i32_32 : i32
    scf.if %62 {
      %c0_33 = arith.constant 0 : index
      %c0_34 = arith.constant 0 : index
      %63 = vector.load %arg7[%c0_33, %c0_34] : memref<1x1xf32, #tpu.memory_space<vmem>>, vector<1x1xf32>
      %64 = vector.extract %63[0, 0] : f32 from vector<1x1xf32>
      %cst_35 = arith.constant 5.000000e-02 : f32
      %65 = arith.mulf %64, %cst_35 : f32
      %c0_36 = arith.constant 0 : index
      %c0_37 = arith.constant 0 : index
      %66 = vector.load %arg9[%c0_36, %c0_37] : memref<1x1xf32, #tpu.memory_space<vmem>>, vector<1x1xf32>
      %67 = vector.extract %66[0, 0] : f32 from vector<1x1xf32>
      %cst_38 = arith.constant 2.500000e-01 : f32
      %68 = arith.mulf %cst_38, %67 : f32
      %69 = arith.addf %65, %68 : f32
      %c0_39 = arith.constant 0 : index
      %c0_40 = arith.constant 0 : index
      %70 = memref.load %arg5[%c0_39, %c0_40] : memref<1x1xf32, #tpu.memory_space<smem>>
      memref.store %69, %arg5[%c0_39, %c0_40] : memref<1x1xf32, #tpu.memory_space<smem>>
      %c0_41 = arith.constant 0 : index
      %c0_42 = arith.constant 0 : index
      %71 = vector.load %arg8[%c0_41, %c0_42] : memref<1x1xf32, #tpu.memory_space<vmem>>, vector<1x1xf32>
      %72 = vector.extract %71[0, 0] : f32 from vector<1x1xf32>
      %cst_43 = arith.constant 5.000000e-02 : f32
      %73 = arith.mulf %72, %cst_43 : f32
      %c0_44 = arith.constant 0 : index
      %c0_45 = arith.constant 0 : index
      %74 = memref.load %arg6[%c0_44, %c0_45] : memref<1x1xf32, #tpu.memory_space<smem>>
      memref.store %73, %arg6[%c0_44, %c0_45] : memref<1x1xf32, #tpu.memory_space<smem>>
    } else {
    }
    return
  }
  func.func @transform_0(%arg0: i32) -> (i32, i32) {
    %c0_i32 = arith.constant 0 : i32
    %c0_i32_0 = arith.constant 0 : i32
    return %arg0, %c0_i32 : i32, i32
  }
  func.func @transform_1(%arg0: i32) -> (i32, i32) {
    %c0_i32 = arith.constant 0 : i32
    %c0_i32_0 = arith.constant 0 : i32
    return %arg0, %c0_i32 : i32, i32
  }
  func.func @transform_2(%arg0: i32) -> (i32, i32) {
    %c0_i32 = arith.constant 0 : i32
    %c0_i32_0 = arith.constant 0 : i32
    return %arg0, %c0_i32 : i32, i32
  }
  func.func @transform_3(%arg0: i32) -> (i32, i32) {
    %c0_i32 = arith.constant 0 : i32
    %c0_i32_0 = arith.constant 0 : i32
    return %arg0, %c0_i32 : i32, i32
  }
  func.func @transform_4(%arg0: i32) -> (i32, i32) {
    %c0_i32 = arith.constant 0 : i32
    %c0_i32_0 = arith.constant 0 : i32
    %c0_i32_1 = arith.constant 0 : i32
    return %c0_i32, %c0_i32_0 : i32, i32
  }
  func.func @transform_5(%arg0: i32) -> (i32, i32) {
    %c0_i32 = arith.constant 0 : i32
    %c0_i32_0 = arith.constant 0 : i32
    %c0_i32_1 = arith.constant 0 : i32
    return %c0_i32, %c0_i32_0 : i32, i32
  }
}

</mosaic_0001>

<llo_original>
// kernel: tpu_custom_call.1
$region0: #{tpu_custom_call.1}
  #allocation0 [shape = 'u32[]', space=smem, size = 0x4, offset = 0x4, fixed_abs, tag = 'smem constant byte address 0x4 - core index']
  #allocation1 [shape = 'u32[72,128]{1,0:T(1,128)}', space=vmem, size = 0x9000, scoped, tag = 'internal scratch']
  #allocation2 [shape = 'f32[1,1]{1,0:T(1,128)}', space=vmem, size = 0x200, scoped, tag = 'scratch operand']
  #allocation3 [shape = 'f32[1,1]{1,0:T(1,128)}', space=vmem, size = 0x200, scoped, tag = 'scratch operand']
  #allocation4 [shape = 'f32[1,1]{1,0:T(1,128)}', space=vmem, size = 0x200, scoped, tag = 'scratch operand']
  %s0 = inlined_call_operand.hbm [shape: f32[20,128], index: 0, kind: input, shape index: {}]
  %s1 = inlined_call_operand.hbm [shape: f32[20,128], index: 1, kind: input, shape index: {}]
  %s2 = inlined_call_operand.hbm [shape: f32[20,128], index: 2, kind: input, shape index: {}]
  %s3 = inlined_call_operand.hbm [shape: f32[20,128], index: 3, kind: input, shape index: {}]
  %s4 = inlined_call_operand.hbm [shape: f32[1,1], index: 4, kind: output, shape index: {0}]
  %s5 = inlined_call_operand.hbm [shape: f32[1,1], index: 5, kind: output, shape index: {1}]
  %6 = xla_tuple %s4, %s5
  %s7 = sld [smem:[#allocation0]]
  $region81: #{tpu_custom_call.1} parent=0
    _
  %s9 = ssub.s32 1, %s7
  %s10 = scalar_select 0, %s9, %s7
  $region1: #{tpu_custom_call.1} parent=0
    #allocation5 [shape = 'u8[16384]{0}', space=vmem, size = 0x4000, scoped, tag = 'input window, operand 0']
    #allocation6 [shape = 's32[2]{0}', space=sflag, size = 0x8, scoped, tag = 'scoped memory for tpu_custom_call.1']
    #allocation7 [shape = 's32[2]{0}', space=sflag, size = 0x8, scoped, tag = 'scoped memory for tpu_custom_call.1']
    #allocation8 [shape = 'u8[16384]{0}', space=vmem, size = 0x4000, scoped, tag = 'input window, operand 1']
    #allocation9 [shape = 's32[2]{0}', space=sflag, size = 0x8, scoped, tag = 'scoped memory for tpu_custom_call.1']
    #allocation10 [shape = 'u8[16384]{0}', space=vmem, size = 0x4000, scoped, tag = 'input window, operand 2']
    #allocation11 [shape = 'u8[16384]{0}', space=vmem, size = 0x4000, scoped, tag = 'input window, operand 3']
    #allocation12 [shape = 's32[2]{0}', space=sflag, size = 0x8, scoped, tag = 'scoped memory for tpu_custom_call.1']
    #allocation13 [shape = 'u8[512]{0}', space=smem, size = 0x200, scoped, tag = 'output window, operand 0, single buffered']
    #allocation14 [shape = 'u8[512]{0}', space=smem, size = 0x200, scoped, tag = 'output window, operand 1, single buffered']
    #allocation15 [shape = 's32[1]{0}', space=sflag, size = 0x4, scoped, tag = 'scoped memory for tpu_custom_call.1']
    %11 = vsyncpa [#allocation6], 0
    %s12 = scalar_lea.sflag [#allocation6], 1
    %13 = vsyncpa %s12, 0
    %14 = vsyncpa [#allocation9], 0
    %s15 = scalar_lea.sflag [#allocation9], 1
    %16 = vsyncpa %s15, 0
    %17 = vsyncpa [#allocation12], 0
    %s18 = scalar_lea.sflag [#allocation12], 1
    %19 = vsyncpa %s18, 0
    %20 = vsyncpa [#allocation7], 0
    %21 = vsyncpa [#allocation15], 0
    loop: start=0, step=1, limit=4
    $region2: #{tpu_custom_call.1} parent=1 // loop_pre_header
      _
    $region3: #{tpu_custom_call.1} parent=1 // loop_header
      %s23 = sphi 0, %s27
      %p24 = scmp.ge.s32.totalorder %s23, 4
      %s33 = sphi 0, %s35
      %s36 = sphi 0, %s33
      %s37 = sphi 0, %s36
      %s53 = sphi 0, %s37
      %s59 = sphi 0, %s61
      %s62 = sphi 0, %s59
      %s63 = sphi 0, %s62
      %s79 = sphi 0, %s63
      %s85 = sphi 0, %s87
      %s88 = sphi 0, %s85
      %s89 = sphi 0, %s88
      %s105 = sphi 0, %s89
      %s111 = sphi 0, %s113
      %s114 = sphi 0, %s111
      %s115 = sphi 0, %s114
      %s131 = sphi 0, %s115
      %s135 = sphi 0, %s135
      %s137 = sphi 0, %s135
      %s138 = sphi 0, %s137
      %s152 = sphi 0, %s138
      %s156 = sphi 0, %s156
      %s158 = sphi 0, %s156
      %s159 = sphi 0, %s158
      %s173 = sphi 0, %s159
    $region4: #{tpu_custom_call.1} parent=1 // loop_header_branch
      %26 = sbr.rel (%p24) target = $region8
    $region5: #{tpu_custom_call.1} parent=1 // loop_body
      %s28 = ssub.s32 %s23, 1
      %s29 = ssub.s32 %s23, 2
      %s30 = sadd.s32 %s23, 1
      %s31 = ssub.s32 %s23, %s30
      %p32 = scmp.eq.s32.totalorder %s31, 0
      %s34 = sadd.s32 %s33, 1
      %s35 = scalar_select %p32, %s33, %s34
      %p38 = pneg %p32
      %p39 = scmp.eq.s32.totalorder %s23, 1
      %p40 = por %p38, %p39
      %p41 = scmp.ne.s32.totalorder %s33, %s36
      %p42 = scmp.eq.s32.totalorder %s23, 0
      %p43 = por %p41, %p42
      %p44 = scmp.ne.s32.totalorder %s33, %s36
      %p45 = scmp.eq.s32.totalorder %s28, 1
      %p46 = por %p44, %p45
      %p47 = scmp.ne.s32.totalorder %s36, %s37
      %p48 = scmp.eq.s32.totalorder %s28, 0
      %p49 = por %p47, %p48
      %p50 = scmp.ne.s32.totalorder %s36, %s37
      %p51 = scmp.eq.s32.totalorder %s29, 1
      %p52 = por %p50, %p51
      %p54 = scmp.ne.s32.totalorder %s37, %s53
      %p55 = scmp.eq.s32.totalorder %s29, 0
      %p56 = por %p54, %p55
      %s57 = ssub.s32 %s23, %s30
      %p58 = scmp.eq.s32.totalorder %s57, 0
      %s60 = sadd.s32 %s59, 1
      %s61 = scalar_select %p58, %s59, %s60
      %p64 = pneg %p58
      %p65 = scmp.eq.s32.totalorder %s23, 1
      %p66 = por %p64, %p65
      %p67 = scmp.ne.s32.totalorder %s59, %s62
      %p68 = scmp.eq.s32.totalorder %s23, 0
      %p69 = por %p67, %p68
      %p70 = scmp.ne.s32.totalorder %s59, %s62
      %p71 = scmp.eq.s32.totalorder %s28, 1
      %p72 = por %p70, %p71
      %p73 = scmp.ne.s32.totalorder %s62, %s63
      %p74 = scmp.eq.s32.totalorder %s28, 0
      %p75 = por %p73, %p74
      %p76 = scmp.ne.s32.totalorder %s62, %s63
      %p77 = scmp.eq.s32.totalorder %s29, 1
      %p78 = por %p76, %p77
      %p80 = scmp.ne.s32.totalorder %s63, %s79
      %p81 = scmp.eq.s32.totalorder %s29, 0
      %p82 = por %p80, %p81
      %s83 = ssub.s32 %s23, %s30
      %p84 = scmp.eq.s32.totalorder %s83, 0
      %s86 = sadd.s32 %s85, 1
      %s87 = scalar_select %p84, %s85, %s86
      %p90 = pneg %p84
      %p91 = scmp.eq.s32.totalorder %s23, 1
      %p92 = por %p90, %p91
      %p93 = scmp.ne.s32.totalorder %s85, %s88
      %p94 = scmp.eq.s32.totalorder %s23, 0
      %p95 = por %p93, %p94
      %p96 = scmp.ne.s32.totalorder %s85, %s88
      %p97 = scmp.eq.s32.totalorder %s28, 1
      %p98 = por %p96, %p97
      %p99 = scmp.ne.s32.totalorder %s88, %s89
      %p100 = scmp.eq.s32.totalorder %s28, 0
      %p101 = por %p99, %p100
      %p102 = scmp.ne.s32.totalorder %s88, %s89
      %p103 = scmp.eq.s32.totalorder %s29, 1
      %p104 = por %p102, %p103
      %p106 = scmp.ne.s32.totalorder %s89, %s105
      %p107 = scmp.eq.s32.totalorder %s29, 0
      %p108 = por %p106, %p107
      %s109 = ssub.s32 %s23, %s30
      %p110 = scmp.eq.s32.totalorder %s109, 0
      %s112 = sadd.s32 %s111, 1
      %s113 = scalar_select %p110, %s111, %s112
      %p116 = pneg %p110
      %p117 = scmp.eq.s32.totalorder %s23, 1
      %p118 = por %p116, %p117
      %p119 = scmp.ne.s32.totalorder %s111, %s114
      %p120 = scmp.eq.s32.totalorder %s23, 0
      %p121 = por %p119, %p120
      %p122 = scmp.ne.s32.totalorder %s111, %s114
      %p123 = scmp.eq.s32.totalorder %s28, 1
      %p124 = por %p122, %p123
      %p125 = scmp.ne.s32.totalorder %s114, %s115
      %p126 = scmp.eq.s32.totalorder %s28, 0
      %p127 = por %p125, %p126
      %p128 = scmp.ne.s32.totalorder %s114, %s115
      %p129 = scmp.eq.s32.totalorder %s29, 1
      %p130 = por %p128, %p129
      %p132 = scmp.ne.s32.totalorder %s115, %s131
      %p133 = scmp.eq.s32.totalorder %s29, 0
      %p134 = por %p132, %p133
      %s136 = sadd.s32 %s135, 1
      %p139 = scmp.eq.s32.totalorder %s23, 1
      %p140 = scmp.ne.s32.totalorder %s135, %s137
      %p141 = scmp.eq.s32.totalorder %s23, 0
      %p142 = por %p140, %p141
      %p143 = scmp.ne.s32.totalorder %s135, %s137
      %p144 = scmp.eq.s32.totalorder %s28, 1
      %p145 = por %p143, %p144
      %p146 = scmp.ne.s32.totalorder %s137, %s138
      %p147 = scmp.eq.s32.totalorder %s28, 0
      %p148 = por %p146, %p147
      %p149 = scmp.ne.s32.totalorder %s137, %s138
      %p150 = scmp.eq.s32.totalorder %s29, 1
      %p151 = por %p149, %p150
      %p153 = scmp.ne.s32.totalorder %s138, %s152
      %p154 = scmp.eq.s32.totalorder %s29, 0
      %p155 = por %p153, %p154
      %s157 = sadd.s32 %s156, 1
      %p160 = scmp.eq.s32.totalorder %s23, 1
      %p161 = scmp.ne.s32.totalorder %s156, %s158
      %p162 = scmp.eq.s32.totalorder %s23, 0
      %p163 = por %p161, %p162
      %p164 = scmp.ne.s32.totalorder %s156, %s158
      %p165 = scmp.eq.s32.totalorder %s28, 1
      %p166 = por %p164, %p165
      %p167 = scmp.ne.s32.totalorder %s158, %s159
      %p168 = scmp.eq.s32.totalorder %s28, 0
      %p169 = por %p167, %p168
      %p170 = scmp.ne.s32.totalorder %s158, %s159
      %p171 = scmp.eq.s32.totalorder %s29, 1
      %p172 = por %p170, %p171
      %p174 = scmp.ne.s32.totalorder %s159, %s173
      %p175 = scmp.eq.s32.totalorder %s29, 0
      %p176 = por %p174, %p175
      %p177 = scmp.le.s32.totalorder 1, %s23
      %p178 = scmp.lt.s32.totalorder %s23, 3
      %p179 = pnand %p177, %p178
      %p180 = pneg %p179
      // Predicated region
      $region9: #{tpu_custom_call.1} parent=5 // pred_check
        _
      $region10: #{tpu_custom_call.1} parent=5 // pred_check_branch
        %182 = sbr.rel (%p179) target = $region12
      $region11: #{tpu_custom_call.1} parent=5 // pred_region
        %s183 = ssub.s32 %s23, 1
      $region12: #{tpu_custom_call.1} parent=5 // pred_fallthru
        _
      %p184 = scmp.lt.s32.totalorder %s23, 2
      // Predicated region
      $region13: #{tpu_custom_call.1} parent=5 // pred_check
        %p185 = pneg %p184
      $region14: #{tpu_custom_call.1} parent=5 // pred_check_branch
        %187 = sbr.rel (%p185) target = $region16
      $region15: #{tpu_custom_call.1} parent=5 // pred_region
        // Predicated region
        $region17: #{tpu_custom_call.1} parent=15 // pred_check
          %p188 = pneg %p43
        $region18: #{tpu_custom_call.1} parent=15 // pred_check_branch
          %190 = sbr.rel (%p188) target = $region20
        $region19: #{tpu_custom_call.1} parent=15 // pred_region
          %s191 = sand.u32 %s33, 1
          %s192 = scalar_lea.sflag [#allocation6], %s191
          %s193 = sand.u32 %s33, 1
          %s194 = smul.addr %s193, 16
          %s195 = scalar_lea.vmem [#allocation5], %s194
          %s196 = smul.u32 2, %s23
          %s197 = ssub.s32 3, %s196
          %p198 = scmp.lt.s32.totalorder %s197, 2
          %s199 = scalar_select %p198, %s197, 2
          %s200 = smul.u32 8, %s199
          %s201 = ssub.s32 16, %s200
          %s202 = sshll.u32 %s201, 4
          %203 = vsyncadd %s192, %s202
          %p204 = scmp.ne.s32.totalorder 0, %s200
          %s205 = smul.addr %s196, 8
          %s206 = scalar_lea.hbm %s0, %s205
          %s207 = smul.u32 8, %s199
          %s208 = sshll.u32 %s206, 4
          %s209 = int_to_ptr.hbm [resolvable:$true] %s208
          %s210 = sshll.u32 %s195, 4
          %s211 = int_to_ptr.vmem [resolvable:$true] %s210
          %s212 = sshll.u32 %s207, 4
          %216 = dma.hbm_to_vmem [thread:$0]  (%p204), %s209, %s212, %s211, %s192, 128, 128, 8
        $region20: #{tpu_custom_call.1} parent=15 // pred_fallthru
          _
        // Predicated region
        $region21: #{tpu_custom_call.1} parent=15 // pred_check
          %p217 = pneg %p69
        $region22: #{tpu_custom_call.1} parent=15 // pred_check_branch
          %219 = sbr.rel (%p217) target = $region24
        $region23: #{tpu_custom_call.1} parent=15 // pred_region
          %s220 = sand.u32 %s23, 1
          %s221 = scalar_lea.sflag [#allocation9], %s220
          %s222 = sand.u32 %s59, 1
          %s223 = smul.addr %s222, 16
          %s224 = scalar_lea.vmem [#allocation8], %s223
          %s225 = smul.u32 2, %s23
          %s226 = ssub.s32 3, %s225
          %p227 = scmp.lt.s32.totalorder %s226, 2
          %s228 = scalar_select %p227, %s226, 2
          %s229 = smul.u32 8, %s228
          %s230 = ssub.s32 16, %s229
          %s231 = sshll.u32 %s230, 4
          %232 = vsyncadd %s221, %s231
          %p233 = scmp.ne.s32.totalorder 0, %s229
          %s234 = smul.addr %s225, 8
          %s235 = scalar_lea.hbm %s1, %s234
          %s236 = smul.u32 8, %s228
          %s237 = sshll.u32 %s235, 4
          %s238 = int_to_ptr.hbm [resolvable:$true] %s237
          %s239 = sshll.u32 %s224, 4
          %s240 = int_to_ptr.vmem [resolvable:$true] %s239
          %s241 = sshll.u32 %s236, 4
          %245 = dma.hbm_to_vmem [thread:$0]  (%p233), %s238, %s241, %s240, %s221, 128, 128, 8
        $region24: #{tpu_custom_call.1} parent=15 // pred_fallthru
          _
        // Predicated region
        $region25: #{tpu_custom_call.1} parent=15 // pred_check
          %p246 = pneg %p95
        $region26: #{tpu_custom_call.1} parent=15 // pred_check_branch
          %248 = sbr.rel (%p246) target = $region28
        $region27: #{tpu_custom_call.1} parent=15 // pred_region
          %s249 = sand.u32 %s23, 1
          %s250 = scalar_lea.sflag [#allocation9], %s249
          %s251 = sand.u32 %s85, 1
          %s252 = smul.addr %s251, 16
          %s253 = scalar_lea.vmem [#allocation10], %s252
          %s254 = smul.u32 2, %s23
          %s255 = ssub.s32 3, %s254
          %p256 = scmp.lt.s32.totalorder %s255, 2
          %s257 = scalar_select %p256, %s255, 2
          %s258 = smul.u32 8, %s257
          %s259 = ssub.s32 16, %s258
          %s260 = sshll.u32 %s259, 4
          %261 = vsyncadd %s250, %s260
          %p262 = scmp.ne.s32.totalorder 0, %s258
          %s263 = smul.addr %s254, 8
          %s264 = scalar_lea.hbm %s2, %s263
          %s265 = smul.u32 8, %s257
          %s266 = sshll.u32 %s264, 4
          %s267 = int_to_ptr.hbm [resolvable:$true] %s266
          %s268 = sshll.u32 %s253, 4
          %s269 = int_to_ptr.vmem [resolvable:$true] %s268
          %s270 = sshll.u32 %s265, 4
          %274 = dma.hbm_to_vmem [thread:$0]  (%p262), %s267, %s270, %s269, %s250, 128, 128, 8
        $region28: #{tpu_custom_call.1} parent=15 // pred_fallthru
          _
        // Predicated region
        $region29: #{tpu_custom_call.1} parent=15 // pred_check
          %p275 = pneg %p121
        $region30: #{tpu_custom_call.1} parent=15 // pred_check_branch
          %277 = sbr.rel (%p275) target = $region32
        $region31: #{tpu_custom_call.1} parent=15 // pred_region
          %s278 = sand.u32 %s111, 1
          %s279 = scalar_lea.sflag [#allocation12], %s278
          %s280 = sand.u32 %s111, 1
          %s281 = smul.addr %s280, 16
          %s282 = scalar_lea.vmem [#allocation11], %s281
          %s283 = smul.u32 2, %s23
          %s284 = ssub.s32 3, %s283
          %p285 = scmp.lt.s32.totalorder %s284, 2
          %s286 = scalar_select %p285, %s284, 2
          %s287 = smul.u32 8, %s286
          %s288 = ssub.s32 16, %s287
          %s289 = sshll.u32 %s288, 4
          %290 = vsyncadd %s279, %s289
          %p291 = scmp.ne.s32.totalorder 0, %s287
          %s292 = smul.addr %s283, 8
          %s293 = scalar_lea.hbm %s3, %s292
          %s294 = smul.u32 8, %s286
          %s295 = sshll.u32 %s293, 4
          %s296 = int_to_ptr.hbm [resolvable:$true] %s295
          %s297 = sshll.u32 %s282, 4
          %s298 = int_to_ptr.vmem [resolvable:$true] %s297
          %s299 = sshll.u32 %s294, 4
          %303 = dma.hbm_to_vmem [thread:$0]  (%p291), %s296, %s299, %s298, %s279, 128, 128, 8
        $region32: #{tpu_custom_call.1} parent=15 // pred_fallthru
          _
      $region16: #{tpu_custom_call.1} parent=5 // pred_fallthru
        _
      %p304 = scmp.le.s32.totalorder 1, %s23
      %p305 = scmp.lt.s32.totalorder %s23, 3
      %p306 = pnand %p304, %p305
      %p307 = pneg %p306
      // Predicated region
      $region33: #{tpu_custom_call.1} parent=5 // pred_check
        _
      $region34: #{tpu_custom_call.1} parent=5 // pred_check_branch
        %309 = sbr.rel (%p306) target = $region36
      $region35: #{tpu_custom_call.1} parent=5 // pred_region
        %s310 = ssub.s32 %s23, 1
        %s311 = sand.u32 %s36, 1
        %s312 = scalar_lea.sflag [#allocation6], %s311
        %s313 = sand.u32 %s36, 1
        %s314 = smul.addr %s313, 16
        %s315 = scalar_lea.vmem [#allocation5], %s314
        // Predicated region
        $region37: #{tpu_custom_call.1} parent=35 // pred_check
          %p316 = pneg %p49
        $region38: #{tpu_custom_call.1} parent=35 // pred_check_branch
          %318 = sbr.rel (%p316) target = $region40
        $region39: #{tpu_custom_call.1} parent=35 // pred_region
          %320 = dma.done %s312, 256
        $region40: #{tpu_custom_call.1} parent=35 // pred_fallthru
          _
        %s321 = sand.u32 %s28, 1
        %s322 = scalar_lea.sflag [#allocation9], %s321
        %s323 = sand.u32 %s62, 1
        %s324 = smul.addr %s323, 16
        %s325 = scalar_lea.vmem [#allocation8], %s324
        // Predicated region
        $region41: #{tpu_custom_call.1} parent=35 // pred_check
          %p326 = pneg %p75
        $region42: #{tpu_custom_call.1} parent=35 // pred_check_branch
          %328 = sbr.rel (%p326) target = $region44
        $region43: #{tpu_custom_call.1} parent=35 // pred_region
          %330 = dma.done %s322, 256
        $region44: #{tpu_custom_call.1} parent=35 // pred_fallthru
          _
        %s331 = sand.u32 %s28, 1
        %s332 = scalar_lea.sflag [#allocation9], %s331
        %s333 = sand.u32 %s88, 1
        %s334 = smul.addr %s333, 16
        %s335 = scalar_lea.vmem [#allocation10], %s334
        // Predicated region
        $region45: #{tpu_custom_call.1} parent=35 // pred_check
          %p336 = pneg %p101
        $region46: #{tpu_custom_call.1} parent=35 // pred_check_branch
          %338 = sbr.rel (%p336) target = $region48
        $region47: #{tpu_custom_call.1} parent=35 // pred_region
          %340 = dma.done %s332, 256
        $region48: #{tpu_custom_call.1} parent=35 // pred_fallthru
          _
        %s341 = sand.u32 %s114, 1
        %s342 = scalar_lea.sflag [#allocation12], %s341
        %s343 = sand.u32 %s114, 1
        %s344 = smul.addr %s343, 16
        %s345 = scalar_lea.vmem [#allocation11], %s344
        // Predicated region
        $region49: #{tpu_custom_call.1} parent=35 // pred_check
          %p346 = pneg %p127
        $region50: #{tpu_custom_call.1} parent=35 // pred_check_branch
          %348 = sbr.rel (%p346) target = $region52
        $region51: #{tpu_custom_call.1} parent=35 // pred_region
          %350 = dma.done %s342, 256
        $region52: #{tpu_custom_call.1} parent=35 // pred_fallthru
          _
        %s351 = sand.u32 %s36, 1
        %s352 = scalar_lea.sflag [#allocation6], %s351
        %s353 = sand.u32 %s36, 1
        %s354 = smul.addr %s353, 16
        %s355 = scalar_lea.vmem [#allocation5], %s354
        %p356 = pneg %p49
        %p357 = pneg %p46
        %s358 = sand.u32 %s28, 1
        %s359 = scalar_lea.sflag [#allocation9], %s358
        %s360 = sand.u32 %s62, 1
        %s361 = smul.addr %s360, 16
        %s362 = scalar_lea.vmem [#allocation8], %s361
        %p363 = pneg %p75
        %p364 = pneg %p72
        %s365 = sand.u32 %s28, 1
        %s366 = scalar_lea.sflag [#allocation9], %s365
        %s367 = sand.u32 %s88, 1
        %s368 = smul.addr %s367, 16
        %s369 = scalar_lea.vmem [#allocation10], %s368
        %p370 = pneg %p101
        %p371 = pneg %p98
        %s372 = sand.u32 %s114, 1
        %s373 = scalar_lea.sflag [#allocation12], %s372
        %s374 = sand.u32 %s114, 1
        %s375 = smul.addr %s374, 16
        %s376 = scalar_lea.vmem [#allocation11], %s375
        %p377 = pneg %p127
        %p378 = pneg %p124
        %p379 = pneg %p148
        %p380 = pneg %p145
        %p381 = pneg %p169
        %p382 = pneg %p166
        %s383 = smul.u32 2, %s28
        %s384 = ssub.s32 3, %s383
        %p385 = scmp.lt.s32.totalorder %s384, 2
        %s386 = scalar_select %p385, %s384, 2
        %s387 = smul.u32 8, %s386
        %s388 = smul.u32 2, %s28
        %s389 = ssub.s32 3, %s388
        %p390 = scmp.lt.s32.totalorder %s389, 2
        %s391 = scalar_select %p390, %s389, 2
        %s392 = smul.u32 8, %s391
        %s393 = smul.u32 2, %s28
        %s394 = ssub.s32 3, %s393
        %p395 = scmp.lt.s32.totalorder %s394, 2
        %s396 = scalar_select %p395, %s394, 2
        %s397 = smul.u32 8, %s396
        %s398 = smul.u32 2, %s28
        %s399 = ssub.s32 3, %s398
        %p400 = scmp.lt.s32.totalorder %s399, 2
        %s401 = scalar_select %p400, %s399, 2
        %s402 = smul.u32 8, %s401
        %p403 = scmp.eq.s32.totalorder %s28, 0
        // Predicated region
        $region53: #{tpu_custom_call.1} parent=35 // pred_check
          %p404 = pneg %p403
        $region54: #{tpu_custom_call.1} parent=35 // pred_check_branch
          %406 = sbr.rel (%p404) target = $region56
        $region55: #{tpu_custom_call.1} parent=35 // pred_region
          %vm407 = vcmask 0
          %408 = vst.msk [vmem:[#allocation2] sm:$0x1] %vm407, 0.0
          %409 = vst.msk [vmem:[#allocation3] sm:$0x1] %vm407, 0.0
          %410 = vst.msk [vmem:[#allocation4] sm:$0x1] %vm407, 0.0
        $region56: #{tpu_custom_call.1} parent=35 // pred_fallthru
          _
        %v411 = vld [vmem:[%s315] sm:$0xff]
        %v412 = vld [vmem:[%s315 + $0x8] sm:$0xff]
        %v413 = vld [vmem:[%s325] sm:$0xff]
        %v414 = vld [vmem:[%s325 + $0x8] sm:$0xff]
        %v415 = vld [vmem:[%s335] sm:$0xff]
        %v416 = vld [vmem:[%s335 + $0x8] sm:$0xff]
        %v417 = vld [vmem:[%s345] sm:$0xff]
        %v418 = vld [vmem:[%s345 + $0x8] sm:$0xff]
        %v419 = vsub.f32 %v411, %v413
        %v420 = vsub.f32 %v412, %v414
        %v421 = vadd.f32 %v419, 1e-06
        %v422 = vadd.f32 %v420, 1e-06
        %v423 = vmul.f32 %v421, %v421
        %v424 = vmul.f32 %v422, %v422
        %425 = vadd.xlane.f32.xlu0 %v423
        %v426 = vpop.xlane.xlu0 %425
        %427 = vadd.xlane.f32.xlu0 %v424
        %v428 = vpop.xlane.xlu0 %427
        %v429 = vsub.f32 %v411, %v415
        %v430 = vsub.f32 %v412, %v416
        %v431 = vadd.f32 %v429, 1e-06
        %v432 = vadd.f32 %v430, 1e-06
        %v433 = vmul.f32 %v431, %v431
        %v434 = vmul.f32 %v432, %v432
        %435 = vadd.xlane.f32.xlu0 %v433
        %v436 = vpop.xlane.xlu0 %435
        %437 = vadd.xlane.f32.xlu0 %v434
        %v438 = vpop.xlane.xlu0 %437
        %v439 = vrsqrt.pop %v426
        %v440 = vmul.f32 %v439, %v426
        %v441 = vmul.f32 %v440, %v439
        %v442 = vmul.f32 0.5, %v441
        %v443 = vsub.f32 1.5, %v442
        %v444 = vmul.f32 %v439, %v443
        %v445 = vmul.f32 %v426, %v444
        %vm446 = vcmp.eq.f32.partialorder %v426, inf
        %v447 = vsel %vm446, %v426, %v445
        %vm448 = vcmp.eq.f32.partialorder %v426, 0.0
        %v449 = vand.u32 %v426, 2147483648
        %v450 = vsel %vm448, %v449, %v447
        %v451 = vrsqrt.pop %v428
        %v452 = vmul.f32 %v451, %v428
        %v453 = vmul.f32 %v452, %v451
        %v454 = vmul.f32 0.5, %v453
        %v455 = vsub.f32 1.5, %v454
        %v456 = vmul.f32 %v451, %v455
        %v457 = vmul.f32 %v428, %v456
        %vm458 = vcmp.eq.f32.partialorder %v428, inf
        %v459 = vsel %vm458, %v428, %v457
        %vm460 = vcmp.eq.f32.partialorder %v428, 0.0
        %v461 = vand.u32 %v428, 2147483648
        %v462 = vsel %vm460, %v461, %v459
        %v463 = vrsqrt.pop %v436
        %v464 = vmul.f32 %v463, %v436
        %v465 = vmul.f32 %v464, %v463
        %v466 = vmul.f32 0.5, %v465
        %v467 = vsub.f32 1.5, %v466
        %v468 = vmul.f32 %v463, %v467
        %v469 = vmul.f32 %v436, %v468
        %vm470 = vcmp.eq.f32.partialorder %v436, inf
        %v471 = vsel %vm470, %v436, %v469
        %vm472 = vcmp.eq.f32.partialorder %v436, 0.0
        %v473 = vand.u32 %v436, 2147483648
        %v474 = vsel %vm472, %v473, %v471
        %v475 = vrsqrt.pop %v438
        %v476 = vmul.f32 %v475, %v438
        %v477 = vmul.f32 %v476, %v475
        %v478 = vmul.f32 0.5, %v477
        %v479 = vsub.f32 1.5, %v478
        %v480 = vmul.f32 %v475, %v479
        %v481 = vmul.f32 %v438, %v480
        %vm482 = vcmp.eq.f32.partialorder %v438, inf
        %v483 = vsel %vm482, %v438, %v481
        %vm484 = vcmp.eq.f32.partialorder %v438, 0.0
        %v485 = vand.u32 %v438, 2147483648
        %v486 = vsel %vm484, %v485, %v483
        %v487 = vsub.f32 %v450, %v474
        %v488 = vsub.f32 %v462, %v486
        %v489 = vadd.f32 %v487, 1.0
        %v490 = vadd.f32 %v488, 1.0
        %v491 = vmax.f32 %v489, 0.0
        %v492 = vmax.f32 %v490, 0.0
        %vm493 = vcmp.gt.f32.partialorder %v436, %v426
        %vm494 = vcmp.gt.f32.partialorder %v438, %v428
        %v495 = vsel %vm493, 1, 0
        %v496 = vsel %vm494, 1, 0
        %v497 = vcvt.s32.f32 %v495
        %v498 = vcvt.s32.f32 %v496
        %v499 = vsub.f32 %v417, %v411
        %v500 = vsub.f32 %v418, %v412
        %v501 = vmul.f32 %v499, %v499
        %v502 = vmul.f32 %v500, %v500
        %503 = vadd.xlane.f32.xlu0 %v501
        %v504 = vpop.xlane.xlu0 %503
        %505 = vadd.xlane.f32.xlu0 %v502
        %v506 = vpop.xlane.xlu0 %505
        %v507 = vlaneseq
        %v508 = vshrl.u32 %v507, 7
        %v509 = vadd.s32 %v508, 8
        %s510 = smul.u32 %s28, 16
        %v511 = vstv %s510
        %v512 = vadd.s32 %v508, %v511
        %v513 = vadd.s32 %v509, %v511
        %vm514 = vcmp.lt.s32.totalorder %v512, 20
        %vm515 = vcmp.lt.s32.totalorder %v513, 20
        %v516 = vsel %vm514, %v491, 0.0
        %v517 = vsel %vm515, %v492, 0.0
        %v518 = vsel %vm514, %v497, 0.0
        %v519 = vsel %vm515, %v498, 0.0
        %v520 = vsel %vm514, %v504, 0.0
        %v521 = vsel %vm515, %v506, 0.0
        %v522 = vld [vmem:[#allocation2] sm:$0x1]
        %v523 = vadd.f32 %v516, %v517
        %v524 = vrot.slane %v523, 4
        %v525 = vadd.f32 %v523, %v524
        %v526 = vrot.slane %v525, 2
        %v527 = vadd.f32 %v525, %v526
        %v528 = vrot.slane %v527, 1
        %v529 = vadd.f32 %v527, %v528
        %v530 = vadd.f32 %v522, %v529
        %vm531 = vcmask 0
        %532 = vst.msk [vmem:[#allocation2] sm:$0x1] %vm531, %v530
        %v533 = vld [vmem:[#allocation3] sm:$0x1]
        %v534 = vadd.f32 %v518, %v519
        %v535 = vrot.slane %v534, 4
        %v536 = vadd.f32 %v534, %v535
        %v537 = vrot.slane %v536, 2
        %v538 = vadd.f32 %v536, %v537
        %v539 = vrot.slane %v538, 1
        %v540 = vadd.f32 %v538, %v539
        %v541 = vadd.f32 %v533, %v540
        %542 = vst.msk [vmem:[#allocation3] sm:$0x1] %vm531, %v541
        %v543 = vld [vmem:[#allocation4] sm:$0x1]
        %v544 = vadd.f32 %v520, %v521
        %v545 = vrot.slane %v544, 4
        %v546 = vadd.f32 %v544, %v545
        %v547 = vrot.slane %v546, 2
        %v548 = vadd.f32 %v546, %v547
        %v549 = vrot.slane %v548, 1
        %v550 = vadd.f32 %v548, %v549
        %v551 = vadd.f32 %v543, %v550
        %552 = vst.msk [vmem:[#allocation4] sm:$0x1] %vm531, %v551
        %p553 = scmp.eq.s32.totalorder %s28, 1
        // Predicated region
        $region57: #{tpu_custom_call.1} parent=35 // pred_check
          %p554 = pneg %p553
        $region58: #{tpu_custom_call.1} parent=35 // pred_check_branch
          %556 = sbr.rel (%p554) target = $region60
        $region59: #{tpu_custom_call.1} parent=35 // pred_region
          %v557 = vld [vmem:[#allocation2] sm:$0x1]
          %s558 = vtos %v557
          %s559 = smul.f32 %s558, 0.05
          %v560 = vld [vmem:[#allocation4] sm:$0x1]
          %s561 = vtos %v560
          %s562 = smul.f32 %s561, 0.25
          %s563 = sadd.f32 %s559, %s562
          %s564 = scalar_lea.smem [#allocation13], 0
          %565 = sst [smem:[%s564]] %s563
          %v566 = vld [vmem:[#allocation3] sm:$0x1]
          %s567 = vtos %v566
          %s568 = smul.f32 %s567, 0.05
          %s569 = scalar_lea.smem [#allocation14], 0
          %570 = sst [smem:[%s569]] %s568
        $region60: #{tpu_custom_call.1} parent=35 // pred_fallthru
          _
        // Predicated region
        $region61: #{tpu_custom_call.1} parent=35 // pred_check
          %p571 = pneg %p145
        $region62: #{tpu_custom_call.1} parent=35 // pred_check_branch
          %573 = sbr.rel (%p571) target = $region64
        $region63: #{tpu_custom_call.1} parent=35 // pred_region
          %575 = vsyncadd [#allocation7], 0
          %s577 = sshll.u32 %s4, 4
          %s578 = int_to_ptr.hbm [resolvable:$true] %s577
          %580 = dma.smem_to_hbm [#allocation13], 16, %s578, [#allocation7]
        $region64: #{tpu_custom_call.1} parent=35 // pred_fallthru
          _
        // Predicated region
        $region65: #{tpu_custom_call.1} parent=35 // pred_check
          %p581 = pneg %p166
        $region66: #{tpu_custom_call.1} parent=35 // pred_check_branch
          %583 = sbr.rel (%p581) target = $region68
        $region67: #{tpu_custom_call.1} parent=35 // pred_region
          %585 = vsyncadd [#allocation15], 0
          %s587 = sshll.u32 %s5, 4
          %s588 = int_to_ptr.hbm [resolvable:$true] %s587
          %590 = dma.smem_to_hbm [#allocation14], 16, %s588, [#allocation15]
        $region68: #{tpu_custom_call.1} parent=35 // pred_fallthru
          _
        // Predicated region
        $region69: #{tpu_custom_call.1} parent=35 // pred_check
          %p591 = pneg %p145
        $region70: #{tpu_custom_call.1} parent=35 // pred_check_branch
          %593 = sbr.rel (%p591) target = $region72
        $region71: #{tpu_custom_call.1} parent=35 // pred_region
          %595 = dma.done [#allocation7], 16
        $region72: #{tpu_custom_call.1} parent=35 // pred_fallthru
          _
        // Predicated region
        $region73: #{tpu_custom_call.1} parent=35 // pred_check
          %p596 = pneg %p166
        $region74: #{tpu_custom_call.1} parent=35 // pred_check_branch
          %598 = sbr.rel (%p596) target = $region76
        $region75: #{tpu_custom_call.1} parent=35 // pred_region
          %600 = dma.done [#allocation15], 16
        $region76: #{tpu_custom_call.1} parent=35 // pred_fallthru
          _
        %601 = sfence
      $region36: #{tpu_custom_call.1} parent=5 // pred_fallthru
        _
      %p602 = scmp.le.s32.totalorder 2, %s23
      // Predicated region
      $region77: #{tpu_custom_call.1} parent=5 // pred_check
        %p603 = pneg %p602
      $region78: #{tpu_custom_call.1} parent=5 // pred_check_branch
        %605 = sbr.rel (%p603) target = $region80
      $region79: #{tpu_custom_call.1} parent=5 // pred_region
        %s606 = ssub.s32 %s23, 2
      $region80: #{tpu_custom_call.1} parent=5 // pred_fallthru
        _
    $region6: #{tpu_custom_call.1} parent=1 // loop_footer
      %s27 = sadd.s32 1, %s23
    $region7: #{tpu_custom_call.1} parent=1 // loop_footer_branch
      %22 = sbr.rel target = $region3
    $region8: #{tpu_custom_call.1} parent=1 // loop_exit
      _
    %607 = vsyncpa [#allocation6], 1
    %s608 = scalar_lea.sflag [#allocation6], 1
    %609 = vsyncpa %s608, 1
    %610 = vsyncpa [#allocation9], 1
    %s611 = scalar_lea.sflag [#allocation9], 1
    %612 = vsyncpa %s611, 1
    %613 = vsyncpa [#allocation12], 1
    %s614 = scalar_lea.sflag [#allocation12], 1
    %615 = vsyncpa %s614, 1
    %616 = vsyncpa [#allocation7], 1
    %s617 = scalar_lea.sflag [#allocation7], 1
    %618 = vsyncpa %s617, 1
    %619 = vsyncpa [#allocation15], 1

</llo_original>
